<compile_context>
chip_gen: v6e
topology: v6e:2x2x1
jax: 0.10.0
libtpu: 0.0.40
codegen_flags: <defaults>
</compile_context>

<pallas_src>
import functools

import jax
import jax.numpy as jnp
from jax.experimental import pallas as pl
from jax.experimental.pallas import tpu as pltpu

LANE = 128


def _round_up(x, m):
    return ((x + m - 1) // m) * m


def value_mlp_kernel(xt_ref, w1_ref, b1_ref, w2_ref, b2_ref, w3_ref, b3_ref, o_ref):
    # xt_ref: (D, bt) feature-major batch tile; all activations are (rows, bt)
    # -> fully lane-dense along the batch axis.
    xt = xt_ref[...]                                                   # (D,  bt)
    h1 = jnp.tanh(
        jnp.dot(w1_ref[...], xt, preferred_element_type=jnp.float32) + b1_ref[...]
    )                                                                  # (32, bt)
    h2 = jnp.tanh(
        jnp.dot(w2_ref[...], h1, preferred_element_type=jnp.float32) + b2_ref[...]
    )                                                                  # (16, bt)
    # Value head: single output column -> VPU multiply + sublane reduce
    # (no MXU push/pop round trip for a (16 x 1) degenerate matmul).
    v = jnp.sum(w3_ref[...] * h2, axis=0, keepdims=True) + b3_ref[0]   # (1,  bt)
    o_ref[...] = jnp.tanh(v).astype(o_ref.dtype)


@functools.partial(jax.jit, static_argnames=("batch_tile",))
def value_forward(x, params, batch_tile=512):
    """x: (B, num_inputs) float32 -> (B, 1) float32."""
    w1, b1, w2, b2, w3, b3 = params
    B, D = x.shape
    H1 = w1.shape[0]        # 32
    H2 = w2.shape[0]        # 16

    # Lane-aligned batch tile: small batches become a single grid step,
    # large batches get many "parallel" steps (keeps both v7x TCs busy).
    bt = _round_up(min(batch_tile, _round_up(B, LANE)), LANE)
    Bp = _round_up(B, bt)
    grid = (Bp // bt,)

    # Feature-major input in HBM: contiguous bt*4-byte rows per DMA.
    xt = x.T
    if Bp != B:
        xt = jnp.pad(xt, ((0, 0), (0, Bp - B)))

    in_specs = [
        pl.BlockSpec((D, bt), lambda i: (0, i)),              # x tile (feature-major)
        pl.BlockSpec((H1, D), lambda i: (0, 0)),              # W1 (out, in)
        pl.BlockSpec((H1, 1), lambda i: (0, 0)),              # b1 column
        pl.BlockSpec((H2, H1), lambda i: (0, 0)),             # W2 (out, in)
        pl.BlockSpec((H2, 1), lambda i: (0, 0)),              # b2 column
        pl.BlockSpec((H2, 1), lambda i: (0, 0)),              # W3 column (in, 1)
        pl.BlockSpec(memory_space=pltpu.MemorySpace.SMEM),    # b3 scalar in SMEM
    ]
    # Lane-dense output slab (1, Bp); wrapper reshapes back to (B, 1).
    out_spec = pl.BlockSpec((1, bt), lambda i: (0, i))

    flops = 2 * Bp * (D * H1 + H1 * H2 + H2)
    transcendentals = Bp * (H1 + H2 + 1)
    bytes_accessed = 4 * (Bp * D + Bp + H1 * D + H1 + H2 * H1 + H2 + H2 + 1)

    out = pl.pallas_call(
        value_mlp_kernel,
        out_shape=jax.ShapeDtypeStruct((1, Bp), jnp.float32),
        grid_spec=pltpu.PrefetchScalarGridSpec(
            num_scalar_prefetch=0,
            grid=grid,
            in_specs=in_specs,
            out_specs=out_spec,
        ),
        compiler_params=pltpu.CompilerParams(
            dimension_semantics=("parallel",),
        ),
        cost_estimate=pl.CostEstimate(
            flops=flops,
            transcendentals=transcendentals,
            bytes_accessed=bytes_accessed,
        ),
    )(xt, w1, b1, w2, b2, w3, b3)

    return out[:, :B].T            # (B, 1)


def init_value_params(key, num_inputs):
    """PyTorch nn.Linear default init: U(-1/sqrt(fan_in), +1/sqrt(fan_in)).
    Weights stored (out, in); biases stored as (out, 1) columns; the value head
    is a (16, 1) column with weight *= 0.1 and a scalar bias *= 0.0."""
    def linear_init(k, fan_in, fan_out):
        kw, kb = jax.random.split(k)
        bound = 1.0 / jnp.sqrt(jnp.float32(fan_in))
        w = jax.random.uniform(kw, (fan_out, fan_in), jnp.float32, -bound, bound)
        b = jax.random.uniform(kb, (fan_out, 1), jnp.float32, -bound, bound)
        return w, b

    k1, k2, k3 = jax.random.split(key, 3)
    w1, b1 = linear_init(k1, num_inputs, 32)
    w2, b2 = linear_init(k2, 32, 16)
    w3, b3 = linear_init(k3, 16, 1)
    w3 = w3.T * 0.1                  # (16, 1); value_head.weight.data.mul_(0.1)
    b3 = b3.reshape((1,)) * 0.0      # scalar;  value_head.bias.data.mul_(0.0)
    return (w1, b1, w2, b2, w3, b3)


def value_forward_ref(x, params):
    w1, b1, w2, b2, w3, b3 = params
    h1 = jnp.tanh(x @ w1.T + b1.T)
    h2 = jnp.tanh(h1 @ w2.T + b2.T)
    return jnp.tanh(h2 @ w3 + b3)


if __name__ == "__main__":
    key = jax.random.PRNGKey(0)
    kx, kp = jax.random.split(key)

    num_inputs = 11   # small continuous-control observation dim
    params = init_value_params(kp, num_inputs)

    # Small batch: single (lane-padded) grid step.
    x_small = jax.random.normal(kx, (8, num_inputs), dtype=jnp.float32)
    out_small = jax.block_until_ready(value_forward(x_small, params))
    ref_small = value_forward_ref(x_small, params)
    assert out_small.shape == (8, 1), out_small.shape
    assert jnp.allclose(out_small, ref_small, atol=1e-5, rtol=1e-5)

    # Larger batch: exercises batch padding + multiple parallel grid steps.
    x_big = jax.random.normal(kx, (1000, num_inputs), dtype=jnp.float32)
    out_big = jax.block_until_ready(value_forward(x_big, params))
    ref_big = value_forward_ref(x_big, params)
    assert out_big.shape == (1000, 1), out_big.shape
    assert jnp.allclose(out_big, ref_big, atol=1e-5, rtol=1e-5)

    print("KERNEL_OK")
</pallas_src>

<mosaic_0001>
module attributes {stable_mosaic.version = 11 : i64} {
  func.func @value_mlp_kernel(%arg0: i32, %arg1: memref<11x128xf32, #tpu.memory_space<vmem>>, %arg2: memref<32x11xf32, #tpu.memory_space<vmem>>, %arg3: memref<32x1xf32, #tpu.memory_space<vmem>>, %arg4: memref<16x32xf32, #tpu.memory_space<vmem>>, %arg5: memref<16x1xf32, #tpu.memory_space<vmem>>, %arg6: memref<16x1xf32, #tpu.memory_space<vmem>>, %arg7: memref<1xf32, #tpu.memory_space<smem>>, %arg8: memref<1x128xf32, #tpu.memory_space<vmem>>) attributes {dimension_semantics = [#tpu.dimension_semantics<parallel>], iteration_bounds = array<i64: 1>, scalar_prefetch = 0 : i64, scratch_operands = 0 : i64, tpu.core_type = #tpu.core_type<tc>, window_params = [{transform_indices = @transform_0, window_bounds = array<i64: 11, 128>}, {pipeline_mode = #tpu.pipeline_mode<synchronous>, transform_indices = @transform_1, window_bounds = array<i64: 32, 11>}, {pipeline_mode = #tpu.pipeline_mode<synchronous>, transform_indices = @transform_2, window_bounds = array<i64: 32, 1>}, {pipeline_mode = #tpu.pipeline_mode<synchronous>, transform_indices = @transform_3, window_bounds = array<i64: 16, 32>}, {pipeline_mode = #tpu.pipeline_mode<synchronous>, transform_indices = @transform_4, window_bounds = array<i64: 16, 1>}, {pipeline_mode = #tpu.pipeline_mode<synchronous>, transform_indices = @transform_5, window_bounds = array<i64: 16, 1>}, {transform_indices = @transform_6, window_bounds = array<i64: 1>}, {transform_indices = @transform_7, window_bounds = array<i64: 1, 128>}]} {
    %c0 = arith.constant 0 : index
    %c0_0 = arith.constant 0 : index
    %0 = vector.load %arg1[%c0, %c0_0] : memref<11x128xf32, #tpu.memory_space<vmem>>, vector<11x128xf32>
    %c0_1 = arith.constant 0 : index
    %c0_2 = arith.constant 0 : index
    %1 = vector.load %arg2[%c0_1, %c0_2] : memref<32x11xf32, #tpu.memory_space<vmem>>, vector<32x11xf32>
    %cst = arith.constant dense<0.000000e+00> : vector<32x128xf32>
    %2 = tpu.matmul %1, %0, %cst {dimension_numbers = #tpu.dot_dimension_numbers<[1], [0], [0], [1], [0, 0, 1, 1], [], []>} : vector<32x11xf32>, vector<11x128xf32>, vector<32x128xf32> -> vector<32x128xf32>
    %c0_3 = arith.constant 0 : index
    %c0_4 = arith.constant 0 : index
    %3 = vector.load %arg3[%c0_3, %c0_4] : memref<32x1xf32, #tpu.memory_space<vmem>>, vector<32x1xf32>
    %4 = vector.broadcast %3 : vector<32x1xf32> to vector<32x128xf32>
    %5 = arith.addf %2, %4 : vector<32x128xf32>
    %6 = math.tanh %5 : vector<32x128xf32>
    %c0_5 = arith.constant 0 : index
    %c0_6 = arith.constant 0 : index
    %7 = vector.load %arg4[%c0_5, %c0_6] : memref<16x32xf32, #tpu.memory_space<vmem>>, vector<16x32xf32>
    %cst_7 = arith.constant dense<0.000000e+00> : vector<16x128xf32>
    %8 = tpu.matmul %7, %6, %cst_7 {dimension_numbers = #tpu.dot_dimension_numbers<[1], [0], [0], [1], [0, 0, 1, 1], [], []>} : vector<16x32xf32>, vector<32x128xf32>, vector<16x128xf32> -> vector<16x128xf32>
    %c0_8 = arith.constant 0 : index
    %c0_9 = arith.constant 0 : index
    %9 = vector.load %arg5[%c0_8, %c0_9] : memref<16x1xf32, #tpu.memory_space<vmem>>, vector<16x1xf32>
    %10 = vector.broadcast %9 : vector<16x1xf32> to vector<16x128xf32>
    %11 = arith.addf %8, %10 : vector<16x128xf32>
    %12 = math.tanh %11 : vector<16x128xf32>
    %c0_10 = arith.constant 0 : index
    %c0_11 = arith.constant 0 : index
    %13 = vector.load %arg6[%c0_10, %c0_11] : memref<16x1xf32, #tpu.memory_space<vmem>>, vector<16x1xf32>
    %14 = vector.broadcast %13 : vector<16x1xf32> to vector<16x128xf32>
    %15 = arith.mulf %14, %12 : vector<16x128xf32>
    %cst_12 = arith.constant dense<0.000000e+00> : vector<128xf32>
    %16 = vector.multi_reduction <add>, %15, %cst_12 [0] : vector<16x128xf32> to vector<128xf32>
    %17 = vector.shape_cast %16 : vector<128xf32> to vector<1x128xf32>
    %c0_13 = arith.constant 0 : index
    %18 = memref.load %arg7[%c0_13] : memref<1xf32, #tpu.memory_space<smem>>
    %19 = vector.broadcast %18 : f32 to vector<1x128xf32>
    %20 = arith.addf %17, %19 : vector<1x128xf32>
    %21 = math.tanh %20 : vector<1x128xf32>
    %c0_14 = arith.constant 0 : index
    %c0_15 = arith.constant 0 : index
    %22 = vector.load %arg8[%c0_14, %c0_15] : memref<1x128xf32, #tpu.memory_space<vmem>>, vector<1x128xf32>
    tpu.vector_store %arg8[%c0_14, %c0_15], %21 {strides = array<i32>} : memref<1x128xf32, #tpu.memory_space<vmem>>, vector<1x128xf32>,
    return
  }
  func.func @transform_0(%arg0: i32) -> (i32, i32) {
    %c0_i32 = arith.constant 0 : i32
    %c0_i32_0 = arith.constant 0 : i32
    return %c0_i32, %arg0 : i32, i32
  }
  func.func @transform_1(%arg0: i32) -> (i32, i32) {
    %c0_i32 = arith.constant 0 : i32
    %c0_i32_0 = arith.constant 0 : i32
    %c0_i32_1 = arith.constant 0 : i32
    return %c0_i32, %c0_i32_0 : i32, i32
  }
  func.func @transform_2(%arg0: i32) -> (i32, i32) {
    %c0_i32 = arith.constant 0 : i32
    %c0_i32_0 = arith.constant 0 : i32
    %c0_i32_1 = arith.constant 0 : i32
    return %c0_i32, %c0_i32_0 : i32, i32
  }
  func.func @transform_3(%arg0: i32) -> (i32, i32) {
    %c0_i32 = arith.constant 0 : i32
    %c0_i32_0 = arith.constant 0 : i32
    %c0_i32_1 = arith.constant 0 : i32
    return %c0_i32, %c0_i32_0 : i32, i32
  }
  func.func @transform_4(%arg0: i32) -> (i32, i32) {
    %c0_i32 = arith.constant 0 : i32
    %c0_i32_0 = arith.constant 0 : i32
    %c0_i32_1 = arith.constant 0 : i32
    return %c0_i32, %c0_i32_0 : i32, i32
  }
  func.func @transform_5(%arg0: i32) -> (i32, i32) {
    %c0_i32 = arith.constant 0 : i32
    %c0_i32_0 = arith.constant 0 : i32
    %c0_i32_1 = arith.constant 0 : i32
    return %c0_i32, %c0_i32_0 : i32, i32
  }
  func.func @transform_6(%arg0: i32) -> i32 {
    %c0_i32 = arith.constant 0 : i32
    %c0_i32_0 = arith.constant 0 : i32
    return %c0_i32 : i32
  }
  func.func @transform_7(%arg0: i32) -> (i32, i32) {
    %c0_i32 = arith.constant 0 : i32
    %c0_i32_0 = arith.constant 0 : i32
    return %c0_i32, %arg0 : i32, i32
  }
}

</mosaic_0001>

<llo_original>
// kernel: value_forward.1
$region0: #{value_forward.1}
  #allocation0 [shape = 'u32[]', space=smem, size = 0x4, offset = 0x4, fixed_abs, tag = 'smem constant byte address 0x4 - core index']
  #allocation1 [shape = 'u32[144,128]{1,0:T(1,128)}', space=vmem, size = 0x12000, scoped, tag = 'internal scratch']
  #allocation2 [shape = 'f32[1]{0:T(128)S(6)}', space=smem, size = 0x200, scoped, tag = 'scoped memory for value_forward.1']
  %s0 = inlined_call_operand.vmem [shape: f32[11,128], index: 0, kind: input, shape index: {}]
  %s1 = inlined_call_operand.vmem [shape: f32[32,11], index: 1, kind: input, shape index: {}]
  %s2 = inlined_call_operand.vmem [shape: f32[32,1], index: 2, kind: input, shape index: {}]
  %s3 = inlined_call_operand.vmem [shape: f32[16,32], index: 3, kind: input, shape index: {}]
  %s4 = inlined_call_operand.vmem [shape: f32[16,1], index: 4, kind: input, shape index: {}]
  %s5 = inlined_call_operand.vmem [shape: f32[16,1], index: 5, kind: input, shape index: {}]
  %s6 = inlined_call_operand.<no memory space> [shape: f32[1], index: 6, kind: input, shape index: {}]
  %s7 = inlined_call_operand.vmem [shape: f32[1,128], index: 7, kind: output, shape index: {}]
  %s8 = sld [smem:[#allocation0]]
  $region38: #{value_forward.1} parent=0
    _
  %s10 = ssub.s32 1, %s8
  %s11 = scalar_select 0, %s10, %s8
  %12 = sst [smem:[#allocation2]] %s6
  // Predicated region
  $region2: #{value_forward.1} parent=0 // pred_check
    _
  $region3: #{value_forward.1} parent=0 // pred_check_branch
    %14 = sbr.rel (0) target = $region5
  $region4: #{value_forward.1} parent=0 // pred_region
    _
  $region5: #{value_forward.1} parent=0 // pred_fallthru
    _
  // Predicated region
  $region6: #{value_forward.1} parent=0 // pred_check
    _
  $region7: #{value_forward.1} parent=0 // pred_check_branch
    %16 = sbr.rel (0) target = $region9
  $region8: #{value_forward.1} parent=0 // pred_region
    _
  $region9: #{value_forward.1} parent=0 // pred_fallthru
    _
  // Predicated region
  $region10: #{value_forward.1} parent=0 // pred_check
    _
  $region11: #{value_forward.1} parent=0 // pred_check_branch
    %18 = sbr.rel (0) target = $region13
  $region12: #{value_forward.1} parent=0 // pred_region
    _
  $region13: #{value_forward.1} parent=0 // pred_fallthru
    _
  // Predicated region
  $region14: #{value_forward.1} parent=0 // pred_check
    _
  $region15: #{value_forward.1} parent=0 // pred_check_branch
    %20 = sbr.rel (0) target = $region17
  $region16: #{value_forward.1} parent=0 // pred_region
    _
  $region17: #{value_forward.1} parent=0 // pred_fallthru
    _
  // Predicated region
  $region18: #{value_forward.1} parent=0 // pred_check
    _
  $region19: #{value_forward.1} parent=0 // pred_check_branch
    %22 = sbr.rel (0) target = $region21
  $region20: #{value_forward.1} parent=0 // pred_region
    _
  $region21: #{value_forward.1} parent=0 // pred_fallthru
    _
  // Predicated region
  $region22: #{value_forward.1} parent=0 // pred_check
    _
  $region23: #{value_forward.1} parent=0 // pred_check_branch
    %24 = sbr.rel (0) target = $region25
  $region24: #{value_forward.1} parent=0 // pred_region
    _
  $region25: #{value_forward.1} parent=0 // pred_fallthru
    _
  // Predicated region
  $region26: #{value_forward.1} parent=0 // pred_check
    _
  $region27: #{value_forward.1} parent=0 // pred_check_branch
    %26 = sbr.rel (0) target = $region29
  $region28: #{value_forward.1} parent=0 // pred_region
    _
  $region29: #{value_forward.1} parent=0 // pred_fallthru
    _
  %v27 = vld [vmem:[%s0] sm:$0xff]
  %v28 = vld [vmem:[%s0 + $0x8] sm:$0x7]
  %v29 = vld [vmem:[%s1] sm:$0xff]
  %v30 = vld [vmem:[%s1 + $0x8] sm:$0xff]
  %v31 = vld [vmem:[%s1 + $0x10] sm:$0xff]
  %v32 = vld [vmem:[%s1 + $0x18] sm:$0xff]
  %v33 = vld [vmem:[%s2] sm:$0xff]
  %v34 = vld [vmem:[%s2 + $0x8] sm:$0xff]
  %v35 = vld [vmem:[%s2 + $0x10] sm:$0xff]
  %v36 = vld [vmem:[%s2 + $0x18] sm:$0xff]
  %38 = vset.pattern.permute.xlu0 0
  %39 = vperm.xlu0 %38, %v33
  %v40 = vpop.permute.xlu0 %39
  %43 = vset.pattern.permute.xlu0 0
  %44 = vperm.xlu0 %43, %v34
  %v45 = vpop.permute.xlu0 %44
  %48 = vset.pattern.permute.xlu0 0
  %49 = vperm.xlu0 %48, %v35
  %v50 = vpop.permute.xlu0 %49
  %53 = vset.pattern.permute.xlu0 0
  %54 = vperm.xlu0 %53, %v36
  %v55 = vpop.permute.xlu0 %54
  %vm57 = vcmask 89088
  %v59 = vsel %vm57, %v29, 0
  %v62 = vsel %vm57, %v30, 0
  %v65 = vsel %vm57, %v31, 0
  %v68 = vsel %vm57, %v32, 0
  %vm70 = vcmask 1042432
  %v72 = vsel %vm70, %v28, 0
  %74 = vmatprep.subr.mxu0 0.0
  %75 = vmatpush1.msra.mxu0 0.0
  %76 = vmatprep.subr.mxu0 0.0
  %77 = vmatpush1.msra.mxu0 0.0
  %78 = vmatprep.subr.mxu0 0.0
  %79 = vmatpush1.msra.mxu0 0.0
  %80 = vmatprep.subr.mxu0 0.0
  %81 = vmatpush1.msra.mxu0 0.0
  %82 = vmatprep.subr.mxu0 0.0
  %83 = vmatpush1.msra.mxu0 0.0
  %84 = vmatprep.subr.mxu0 0.0
  %85 = vmatpush1.msra.mxu0 0.0
  %86 = vmatprep.subr.mxu0 0.0
  %87 = vmatpush1.msra.mxu0 0.0
  %88 = vmatprep.subr.mxu0 0.0
  %89 = vmatpush1.msra.mxu0 0.0
  %90 = vmatprep.subr.mxu0 0.0
  %91 = vmatpush1.msra.mxu0 0.0
  %92 = vmatprep.subr.mxu0 0.0
  %93 = vmatpush1.msra.mxu0 0.0
  %94 = vmatprep.subr.mxu0 0.0
  %95 = vmatpush1.msra.mxu0 0.0
  %96 = vmatprep.subr.mxu0 0.0
  %97 = vmatpush1.msra.mxu0 0.0
  %98 = vmatprep.subr.mxu0 0.0
  %99 = vmatpush1.msra.mxu0 0.0
  %100 = vmatprep.subr.mxu0 0.0
  %101 = vmatpush1.msra.mxu0 0.0
  %102 = vmatprep.subr.mxu0 0.0
  %103 = vmatpush1.msra.mxu0 %v72
  %104 = vmatprep.subr.mxu0 0.0
  %105 = vmatpush1.msra.mxu0 %v27
  %106 = vmatprep.subr.mxu0 0.0
  %107 = vmatpush2.msra.mxu0 0.0
  %108 = vmatprep.subr.mxu0 0.0
  %109 = vmatpush2.msra.mxu0 0.0
  %110 = vmatprep.subr.mxu0 0.0
  %111 = vmatpush2.msra.mxu0 0.0
  %112 = vmatprep.subr.mxu0 0.0
  %113 = vmatpush2.msra.mxu0 0.0
  %114 = vmatprep.subr.mxu0 0.0
  %115 = vmatpush2.msra.mxu0 0.0
  %116 = vmatprep.subr.mxu0 0.0
  %117 = vmatpush2.msra.mxu0 0.0
  %118 = vmatprep.subr.mxu0 0.0
  %119 = vmatpush2.msra.mxu0 0.0
  %120 = vmatprep.subr.mxu0 0.0
  %121 = vmatpush2.msra.mxu0 0.0
  %122 = vmatprep.subr.mxu0 0.0
  %123 = vmatpush2.msra.mxu0 0.0
  %124 = vmatprep.subr.mxu0 0.0
  %125 = vmatpush2.msra.mxu0 0.0
  %126 = vmatprep.subr.mxu0 0.0
  %127 = vmatpush2.msra.mxu0 0.0
  %128 = vmatprep.subr.mxu0 0.0
  %129 = vmatpush2.msra.mxu0 0.0
  %130 = vmatprep.subr.mxu0 0.0
  %131 = vmatpush2.msra.mxu0 0.0
  %132 = vmatprep.subr.mxu0 0.0
  %133 = vmatpush2.msra.mxu0 0.0
  %134 = vmatprep.subr.mxu0 0.0
  %135 = vmatpush2.msra.mxu0 0.0
  %136 = vmatprep.subr.mxu0 0.0
  %137 = vmatpush2.msra.mxu0 0.0
  %138 = vmatprep.mubr.f32.mxu0 0.0
  %139 = vmatmul.mubr.f32.gmra.mxu0 %v59
  %v140 = vpop.f32.mrf.mxu0
  %v141 = vadd.f32 %v40, %v140
  %v142 = vpop.f32.mrf.mxu0
  %143 = vmatprep.mubr.f32.mxu0 0.0
  %144 = vmatmul.mubr.f32.gmra.mxu0 %v62
  %v145 = vpop.f32.mrf.mxu0
  %v146 = vadd.f32 %v45, %v145
  %v147 = vpop.f32.mrf.mxu0
  %148 = vmatprep.mubr.f32.mxu0 0.0
  %149 = vmatmul.mubr.f32.gmra.mxu0 %v65
  %v150 = vpop.f32.mrf.mxu0
  %v151 = vadd.f32 %v50, %v150
  %v152 = vpop.f32.mrf.mxu0
  %153 = vmatprep.mubr.f32.mxu0 0.0
  %154 = vmatmul.mubr.f32.gmra.mxu0 %v68
  %v155 = vpop.f32.mrf.mxu0
  %v156 = vadd.f32 %v55, %v155
  %v157 = vpop.f32.mrf.mxu0
  %158 = vdwg.mxu0
  %v159 = vtanh.pop %v141
  %v160 = vtanh.pop %v146
  %v161 = vtanh.pop %v151
  %v162 = vtanh.pop %v156
  %v163 = vld [vmem:[%s3] sm:$0xff]
  %v164 = vld [vmem:[%s3 + $0x8] sm:$0xff]
  %v165 = vld [vmem:[%s4] sm:$0xff]
  %v166 = vld [vmem:[%s4 + $0x8] sm:$0xff]
  %168 = vset.pattern.permute.xlu0 0
  %169 = vperm.xlu0 %168, %v165
  %v170 = vpop.permute.xlu0 %169
  %173 = vset.pattern.permute.xlu0 0
  %174 = vperm.xlu0 %173, %v166
  %v175 = vpop.permute.xlu0 %174
  %vm177 = vcmask 261120
  %v179 = vsel %vm177, %v163, 0
  %v182 = vsel %vm177, %v164, 0
  %184 = vmatprep.subr.mxu0 0.0
  %185 = vmatpush1.msra.mxu0 0.0
  %186 = vmatprep.subr.mxu0 0.0
  %187 = vmatpush1.msra.mxu0 0.0
  %188 = vmatprep.subr.mxu0 0.0
  %189 = vmatpush1.msra.mxu0 0.0
  %190 = vmatprep.subr.mxu0 0.0
  %191 = vmatpush1.msra.mxu0 0.0
  %192 = vmatprep.subr.mxu0 0.0
  %193 = vmatpush1.msra.mxu0 0.0
  %194 = vmatprep.subr.mxu0 0.0
  %195 = vmatpush1.msra.mxu0 0.0
  %196 = vmatprep.subr.mxu0 0.0
  %197 = vmatpush1.msra.mxu0 0.0
  %198 = vmatprep.subr.mxu0 0.0
  %199 = vmatpush1.msra.mxu0 0.0
  %200 = vmatprep.subr.mxu0 0.0
  %201 = vmatpush1.msra.mxu0 0.0
  %202 = vmatprep.subr.mxu0 0.0
  %203 = vmatpush1.msra.mxu0 0.0
  %204 = vmatprep.subr.mxu0 0.0
  %205 = vmatpush1.msra.mxu0 0.0
  %206 = vmatprep.subr.mxu0 0.0
  %207 = vmatpush1.msra.mxu0 0.0
  %208 = vmatprep.subr.mxu0 0.0
  %209 = vmatpush1.msra.mxu0 %v162
  %210 = vmatprep.subr.mxu0 0.0
  %211 = vmatpush1.msra.mxu0 %v161
  %212 = vmatprep.subr.mxu0 0.0
  %213 = vmatpush1.msra.mxu0 %v160
  %214 = vmatprep.subr.mxu0 0.0
  %215 = vmatpush1.msra.mxu0 %v159
  %216 = vmatprep.subr.mxu0 0.0
  %217 = vmatpush2.msra.mxu0 0.0
  %218 = vmatprep.subr.mxu0 0.0
  %219 = vmatpush2.msra.mxu0 0.0
  %220 = vmatprep.subr.mxu0 0.0
  %221 = vmatpush2.msra.mxu0 0.0
  %222 = vmatprep.subr.mxu0 0.0
  %223 = vmatpush2.msra.mxu0 0.0
  %224 = vmatprep.subr.mxu0 0.0
  %225 = vmatpush2.msra.mxu0 0.0
  %226 = vmatprep.subr.mxu0 0.0
  %227 = vmatpush2.msra.mxu0 0.0
  %228 = vmatprep.subr.mxu0 0.0
  %229 = vmatpush2.msra.mxu0 0.0
  %230 = vmatprep.subr.mxu0 0.0
  %231 = vmatpush2.msra.mxu0 0.0
  %232 = vmatprep.subr.mxu0 0.0
  %233 = vmatpush2.msra.mxu0 0.0
  %234 = vmatprep.subr.mxu0 0.0
  %235 = vmatpush2.msra.mxu0 0.0
  %236 = vmatprep.subr.mxu0 0.0
  %237 = vmatpush2.msra.mxu0 0.0
  %238 = vmatprep.subr.mxu0 0.0
  %239 = vmatpush2.msra.mxu0 0.0
  %240 = vmatprep.subr.mxu0 0.0
  %241 = vmatpush2.msra.mxu0 0.0
  %242 = vmatprep.subr.mxu0 0.0
  %243 = vmatpush2.msra.mxu0 0.0
  %244 = vmatprep.subr.mxu0 0.0
  %245 = vmatpush2.msra.mxu0 0.0
  %246 = vmatprep.subr.mxu0 0.0
  %247 = vmatpush2.msra.mxu0 0.0
  %248 = vmatprep.mubr.f32.mxu0 0.0
  %249 = vmatmul.mubr.f32.gmra.mxu0 %v179
  %v250 = vpop.f32.mrf.mxu0
  %v251 = vadd.f32 %v170, %v250
  %v252 = vpop.f32.mrf.mxu0
  %253 = vmatprep.mubr.f32.mxu0 0.0
  %254 = vmatmul.mubr.f32.gmra.mxu0 %v182
  %v255 = vpop.f32.mrf.mxu0
  %v256 = vadd.f32 %v175, %v255
  %v257 = vpop.f32.mrf.mxu0
  %258 = vdwg.mxu0
  %v259 = vtanh.pop %v251
  %v260 = vtanh.pop %v256
  %v261 = vld [vmem:[%s5] sm:$0xff]
  %v262 = vld [vmem:[%s5 + $0x8] sm:$0xff]
  %264 = vset.pattern.permute.xlu0 0
  %265 = vperm.xlu0 %264, %v261
  %v266 = vpop.permute.xlu0 %265
  %269 = vset.pattern.permute.xlu0 0
  %270 = vperm.xlu0 %269, %v262
  %v271 = vpop.permute.xlu0 %270
  %v273 = vmul.f32 %v266, %v259
  %v274 = vmul.f32 %v271, %v260
  %v275 = vadd.f32 %v273, %v274
  %v276 = vrot.slane %v275, 4
  %v277 = vadd.f32 %v275, %v276
  %v278 = vrot.slane %v277, 2
  %v279 = vadd.f32 %v277, %v278
  %v280 = vrot.slane %v279, 1
  %v281 = vadd.f32 %v279, %v280
  %s282 = sld [smem:[#allocation2]]
  %v283 = vstv %s282
  %v284 = vadd.f32 %v281, %v283
  %v285 = vtanh.pop %v284
  %286 = vst [vmem:[%s7] sm:$0x1] %v285
  // Predicated region
  $region30: #{value_forward.1} parent=0 // pred_check
    _
  $region31: #{value_forward.1} parent=0 // pred_check_branch
    %288 = sbr.rel (0) target = $region33
  $region32: #{value_forward.1} parent=0 // pred_region
    _
  $region33: #{value_forward.1} parent=0 // pred_fallthru
    _
  // Predicated region
  $region34: #{value_forward.1} parent=0 // pred_check
    _
  $region35: #{value_forward.1} parent=0 // pred_check_branch
    %290 = sbr.rel (0) target = $region37
  $region36: #{value_forward.1} parent=0 // pred_region
    _
  $region37: #{value_forward.1} parent=0 // pred_fallthru
    _

</llo_original>
